<compile_context>
chip_gen: v6e
topology: v6e:2x2x1
jax: 0.10.0
libtpu: 0.0.40
codegen_flags: <defaults>
</compile_context>

<pallas_src>
import jax
import jax.numpy as jnp
from jax.experimental import pallas as pl
from jax.experimental.pallas import tpu as pltpu


def _round_up(n, m):
    return ((n + m - 1) // m) * m


def _vmem_capacity_bytes():
    try:
        return int(pltpu.get_tpu_info().vmem_capacity_bytes)
    except Exception:
        return 64 * 1024 * 1024  # conservative fallback (v7x physical VMEM)


def _per_row_vmem_bytes(D):
    """Approx. VMEM bytes per batch row live in the pipeline (f32)."""
    d_lanes = 128 * pl.cdiv(D, 128)   # x block is lane-padded to 128
    d_sub = 8 * pl.cdiv(D, 8)         # worst-case x^T staging inside the matmul
    #        x (double-buffered)  x^T    h1^T  h2^T  (1,TB) out, sublane-padded, 2 bufs
    return 4 * (2 * d_lanes + d_sub + 32 + 16 + 2 * 8)


def _choose_tile_rows(B, D, target_x_bytes=4 << 20):
    """Generation-aware batch tile: big enough to hide per-step overhead,
    small enough to fit comfortably in scoped VMEM on v5e/v6e/v7x."""
    per_row = _per_row_vmem_bytes(D)
    budget = min(_vmem_capacity_bytes() // 2, 48 << 20)
    tb_vmem = (budget * 3 // 4) // per_row                 # VMEM-derived ceiling
    tb_dma = max(target_x_bytes // (D * 4), 128)           # ~4 MiB of real x per step
    tb = min(tb_vmem, tb_dma)
    if B >= 4096:
        tb = min(tb, pl.cdiv(B, 4))                        # >= 4 grid steps (v7x megacore)
    tb = max(128, (tb // 128) * 128)                       # lane-dense output rows
    return min(tb, _round_up(B, 128))


def _mlp_kernel(x_ref, w1t_ref, b1_ref, w2t_ref, b2_ref, w3_ref, b3_ref, o_ref):
    # x: (TB, D); w1t: (32, D); b1: (32, 1); w2t: (16, 32); b2: (16, 1)
    # w3: (16, 1); b3: (1, 1); o: (1, TB)  -- the batch tile lives on the lane axis.
    x = x_ref[...]

    # h1^T = W1^T @ x^T, written as an A·B^T contraction (both minor dims contract).
    h1 = jax.lax.dot_general(
        w1t_ref[...], x, (((1,), (1,)), ((), ())),
        preferred_element_type=jnp.float32)                    # (32, TB)
    h1 = jnp.maximum(h1 + b1_ref[...], 0.0)                    # bias + ReLU (lane-dense)

    h2 = jnp.dot(w2t_ref[...], h1,
                 preferred_element_type=jnp.float32)           # (16, TB)
    h2 = jnp.maximum(h2 + b2_ref[...], 0.0)

    # Linear(16, 1): VPU multiply + sublane reduce, result stays lane-dense.
    out = jnp.sum(h2 * w3_ref[...], axis=0, keepdims=True) + b3_ref[...]   # (1, TB)
    o_ref[...] = out.astype(o_ref.dtype)


def my_model_forward(x, params, *, tile_rows=None):
    """x: (B, input_dim) float32 -> (B,) float32 (matches PyTorch squeeze(1))."""
    w1, b1, w2, b2, w3, b3 = params
    B, D = x.shape

    TB = tile_rows if tile_rows is not None else _choose_tile_rows(B, D)
    TB = max(128, _round_up(TB, 128))
    n_tiles = pl.cdiv(B, TB)          # ragged last tile: no pad copy of x

    # Batch-on-lanes weight layouts (tiny arrays, transposed once in the wrapper).
    w1t = w1.T                        # (32, D)
    b1c = b1.reshape(-1, 1)           # (32, 1)
    w2t = w2.T                        # (16, 32)
    b2c = b2.reshape(-1, 1)           # (16, 1)
    w3c = w3.reshape(-1, 1)           # (16, 1)
    b3c = b3.reshape(1, 1)            # (1, 1)

    vmem_limit = int(min(max(32 << 20, _per_row_vmem_bytes(D) * TB + (4 << 20)),
                         100 << 20))

    flops = 2 * B * (D * 32 + 32 * 16 + 16)
    bytes_accessed = (
        B * D * 4 + B * 4
        + 4 * (w1.size + b1.size + w2.size + b2.size + w3.size + b3.size))

    out = pl.pallas_call(
        _mlp_kernel,
        out_shape=jax.ShapeDtypeStruct((n_tiles, TB), jnp.float32),
        grid=(n_tiles,),
        in_specs=[
            pl.BlockSpec((TB, D), lambda i: (i, 0)),     # x: streamed per batch tile
            pl.BlockSpec((32, D), lambda i: (0, 0)),     # W1^T: VMEM resident
            pl.BlockSpec((32, 1), lambda i: (0, 0)),     # b1
            pl.BlockSpec((16, 32), lambda i: (0, 0)),    # W2^T
            pl.BlockSpec((16, 1), lambda i: (0, 0)),     # b2
            pl.BlockSpec((16, 1), lambda i: (0, 0)),     # w3
            pl.BlockSpec((1, 1), lambda i: (0, 0)),      # b3
        ],
        out_specs=pl.BlockSpec((1, TB), lambda i: (i, 0)),  # lane-dense output row
        compiler_params=pltpu.CompilerParams(
            dimension_semantics=("parallel",),           # megacore split on v7x
            vmem_limit_bytes=vmem_limit,
        ),
        cost_estimate=pl.CostEstimate(
            flops=flops, transcendentals=0, bytes_accessed=bytes_accessed),
    )(x, w1t, b1c, w2t, b2c, w3c, b3c)

    return out.reshape(n_tiles * TB)[:B]  # squeeze(1) + drop ragged tail


def init_params(key, input_dim):
    """PyTorch Linear default init (U[-1/sqrt(fan_in), 1/sqrt(fan_in)]).

    Weights stored as (in_features, out_features); the wrapper transposes them."""
    def linear(key, fan_in, fan_out):
        kw, kb = jax.random.split(key)
        bound = 1.0 / jnp.sqrt(fan_in)
        w = jax.random.uniform(kw, (fan_in, fan_out), jnp.float32, -bound, bound)
        b = jax.random.uniform(kb, (1, fan_out), jnp.float32, -bound, bound)
        return w, b

    k1, k2, k3 = jax.random.split(key, 3)
    w1, b1 = linear(k1, input_dim, 32)
    w2, b2 = linear(k2, 32, 16)
    w3, b3 = linear(k3, 16, 1)
    return (w1, b1, w2, b2, w3, b3)


def _reference(x, params):
    w1, b1, w2, b2, w3, b3 = params
    h = jnp.maximum(x @ w1 + b1, 0.0)
    h = jnp.maximum(h @ w2 + b2, 0.0)
    return (h @ w3 + b3)[:, 0]


if __name__ == "__main__":
    key = jax.random.PRNGKey(0)
    kx, kx2, kp = jax.random.split(key, 3)

    batch, input_dim = 8, 24
    x = jax.random.normal(kx, (batch, input_dim), dtype=jnp.float32)
    params = init_params(kp, input_dim)

    y = jax.block_until_ready(my_model_forward(x, params))
    ref = _reference(x, params)
    assert y.shape == (batch,)
    assert jnp.allclose(y, ref, atol=1e-5, rtol=1e-5), float(jnp.max(jnp.abs(y - ref)))

    # Multi-tile + non-divisible batch: exercises the no-pad ragged-last-tile path.
    batch2 = 300
    x2 = jax.random.normal(kx2, (batch2, input_dim), dtype=jnp.float32)
    y2 = jax.block_until_ready(my_model_forward(x2, params, tile_rows=128))
    ref2 = _reference(x2, params)
    assert y2.shape == (batch2,)
    assert jnp.allclose(y2, ref2, atol=1e-5, rtol=1e-5), float(jnp.max(jnp.abs(y2 - ref2)))

    print("KERNEL_OK")
</pallas_src>

<mosaic_0001>
module attributes {stable_mosaic.version = 11 : i64} {
  func.func @_mlp_kernel(%arg0: i32, %arg1: memref<128x24xf32, #tpu.memory_space<vmem>>, %arg2: memref<32x24xf32, #tpu.memory_space<vmem>>, %arg3: memref<32x1xf32, #tpu.memory_space<vmem>>, %arg4: memref<16x32xf32, #tpu.memory_space<vmem>>, %arg5: memref<16x1xf32, #tpu.memory_space<vmem>>, %arg6: memref<16x1xf32, #tpu.memory_space<vmem>>, %arg7: memref<1x1xf32, #tpu.memory_space<vmem>>, %arg8: memref<1x128xf32, #tpu.memory_space<vmem>>) attributes {dimension_semantics = [#tpu.dimension_semantics<parallel>], iteration_bounds = array<i64: 1>, scalar_prefetch = 0 : i64, scratch_operands = 0 : i64, tpu.core_type = #tpu.core_type<tc>, window_params = [{transform_indices = @transform_0, window_bounds = array<i64: 128, 24>}, {pipeline_mode = #tpu.pipeline_mode<synchronous>, transform_indices = @transform_1, window_bounds = array<i64: 32, 24>}, {pipeline_mode = #tpu.pipeline_mode<synchronous>, transform_indices = @transform_2, window_bounds = array<i64: 32, 1>}, {pipeline_mode = #tpu.pipeline_mode<synchronous>, transform_indices = @transform_3, window_bounds = array<i64: 16, 32>}, {pipeline_mode = #tpu.pipeline_mode<synchronous>, transform_indices = @transform_4, window_bounds = array<i64: 16, 1>}, {pipeline_mode = #tpu.pipeline_mode<synchronous>, transform_indices = @transform_5, window_bounds = array<i64: 16, 1>}, {pipeline_mode = #tpu.pipeline_mode<synchronous>, transform_indices = @transform_6, window_bounds = array<i64: 1, 1>}, {transform_indices = @transform_7, window_bounds = array<i64: 1, 128>}]} {
    %c0 = arith.constant 0 : index
    %c0_0 = arith.constant 0 : index
    %0 = vector.load %arg1[%c0, %c0_0] : memref<128x24xf32, #tpu.memory_space<vmem>>, vector<128x24xf32>
    %c0_1 = arith.constant 0 : index
    %c0_2 = arith.constant 0 : index
    %1 = vector.load %arg2[%c0_1, %c0_2] : memref<32x24xf32, #tpu.memory_space<vmem>>, vector<32x24xf32>
    %cst = arith.constant dense<0.000000e+00> : vector<32x128xf32>
    %2 = tpu.matmul %1, %0, %cst {dimension_numbers = #tpu.dot_dimension_numbers<[1], [1], [0], [0], [0, 0, 1, 0], [], []>} : vector<32x24xf32>, vector<128x24xf32>, vector<32x128xf32> -> vector<32x128xf32>
    %c0_3 = arith.constant 0 : index
    %c0_4 = arith.constant 0 : index
    %3 = vector.load %arg3[%c0_3, %c0_4] : memref<32x1xf32, #tpu.memory_space<vmem>>, vector<32x1xf32>
    %4 = vector.broadcast %3 : vector<32x1xf32> to vector<32x128xf32>
    %5 = arith.addf %2, %4 : vector<32x128xf32>
    %cst_5 = arith.constant 0.000000e+00 : f32
    %6 = vector.broadcast %cst_5 : f32 to vector<32x128xf32>
    %7 = arith.maximumf %5, %6 : vector<32x128xf32>
    %c0_6 = arith.constant 0 : index
    %c0_7 = arith.constant 0 : index
    %8 = vector.load %arg4[%c0_6, %c0_7] : memref<16x32xf32, #tpu.memory_space<vmem>>, vector<16x32xf32>
    %cst_8 = arith.constant dense<0.000000e+00> : vector<16x128xf32>
    %9 = tpu.matmul %8, %7, %cst_8 {dimension_numbers = #tpu.dot_dimension_numbers<[1], [0], [0], [1], [0, 0, 1, 1], [], []>} : vector<16x32xf32>, vector<32x128xf32>, vector<16x128xf32> -> vector<16x128xf32>
    %c0_9 = arith.constant 0 : index
    %c0_10 = arith.constant 0 : index
    %10 = vector.load %arg5[%c0_9, %c0_10] : memref<16x1xf32, #tpu.memory_space<vmem>>, vector<16x1xf32>
    %11 = vector.broadcast %10 : vector<16x1xf32> to vector<16x128xf32>
    %12 = arith.addf %9, %11 : vector<16x128xf32>
    %cst_11 = arith.constant 0.000000e+00 : f32
    %13 = vector.broadcast %cst_11 : f32 to vector<16x128xf32>
    %14 = arith.maximumf %12, %13 : vector<16x128xf32>
    %c0_12 = arith.constant 0 : index
    %c0_13 = arith.constant 0 : index
    %15 = vector.load %arg6[%c0_12, %c0_13] : memref<16x1xf32, #tpu.memory_space<vmem>>, vector<16x1xf32>
    %16 = vector.broadcast %15 : vector<16x1xf32> to vector<16x128xf32>
    %17 = arith.mulf %14, %16 : vector<16x128xf32>
    %cst_14 = arith.constant dense<0.000000e+00> : vector<128xf32>
    %18 = vector.multi_reduction <add>, %17, %cst_14 [0] : vector<16x128xf32> to vector<128xf32>
    %19 = vector.shape_cast %18 : vector<128xf32> to vector<1x128xf32>
    %c0_15 = arith.constant 0 : index
    %c0_16 = arith.constant 0 : index
    %20 = vector.load %arg7[%c0_15, %c0_16] : memref<1x1xf32, #tpu.memory_space<vmem>>, vector<1x1xf32>
    %21 = vector.broadcast %20 : vector<1x1xf32> to vector<1x128xf32>
    %22 = arith.addf %19, %21 : vector<1x128xf32>
    %c0_17 = arith.constant 0 : index
    %c0_18 = arith.constant 0 : index
    %23 = vector.load %arg8[%c0_17, %c0_18] : memref<1x128xf32, #tpu.memory_space<vmem>>, vector<1x128xf32>
    tpu.vector_store %arg8[%c0_17, %c0_18], %22 {strides = array<i32>} : memref<1x128xf32, #tpu.memory_space<vmem>>, vector<1x128xf32>,
    return
  }
  func.func @transform_0(%arg0: i32) -> (i32, i32) {
    %c0_i32 = arith.constant 0 : i32
    %c0_i32_0 = arith.constant 0 : i32
    return %arg0, %c0_i32 : i32, i32
  }
  func.func @transform_1(%arg0: i32) -> (i32, i32) {
    %c0_i32 = arith.constant 0 : i32
    %c0_i32_0 = arith.constant 0 : i32
    %c0_i32_1 = arith.constant 0 : i32
    return %c0_i32, %c0_i32_0 : i32, i32
  }
  func.func @transform_2(%arg0: i32) -> (i32, i32) {
    %c0_i32 = arith.constant 0 : i32
    %c0_i32_0 = arith.constant 0 : i32
    %c0_i32_1 = arith.constant 0 : i32
    return %c0_i32, %c0_i32_0 : i32, i32
  }
  func.func @transform_3(%arg0: i32) -> (i32, i32) {
    %c0_i32 = arith.constant 0 : i32
    %c0_i32_0 = arith.constant 0 : i32
    %c0_i32_1 = arith.constant 0 : i32
    return %c0_i32, %c0_i32_0 : i32, i32
  }
  func.func @transform_4(%arg0: i32) -> (i32, i32) {
    %c0_i32 = arith.constant 0 : i32
    %c0_i32_0 = arith.constant 0 : i32
    %c0_i32_1 = arith.constant 0 : i32
    return %c0_i32, %c0_i32_0 : i32, i32
  }
  func.func @transform_5(%arg0: i32) -> (i32, i32) {
    %c0_i32 = arith.constant 0 : i32
    %c0_i32_0 = arith.constant 0 : i32
    %c0_i32_1 = arith.constant 0 : i32
    return %c0_i32, %c0_i32_0 : i32, i32
  }
  func.func @transform_6(%arg0: i32) -> (i32, i32) {
    %c0_i32 = arith.constant 0 : i32
    %c0_i32_0 = arith.constant 0 : i32
    %c0_i32_1 = arith.constant 0 : i32
    return %c0_i32, %c0_i32_0 : i32, i32
  }
  func.func @transform_7(%arg0: i32) -> (i32, i32) {
    %c0_i32 = arith.constant 0 : i32
    %c0_i32_0 = arith.constant 0 : i32
    return %arg0, %c0_i32 : i32, i32
  }
}

</mosaic_0001>

<llo_original>
// kernel: tpu_custom_call.1
$region0: #{tpu_custom_call.1}
  #allocation0 [shape = 'u32[]', space=smem, size = 0x4, offset = 0x4, fixed_abs, tag = 'smem constant byte address 0x4 - core index']
  #allocation1 [shape = 'u32[144,128]{1,0:T(1,128)}', space=vmem, size = 0x12000, scoped, tag = 'internal scratch']
  #allocation2 [shape = 'f32[1,1]{1,0:T(1,128)S(1)}', space=vmem, size = 0x200, scoped, tag = 'scoped memory for tpu_custom_call.1']
  %s0 = inlined_call_operand.vmem [shape: f32[8,24], index: 0, kind: input, shape index: {}]
  %s1 = inlined_call_operand.vmem [shape: f32[32,24], index: 1, kind: input, shape index: {}]
  %s2 = inlined_call_operand.vmem [shape: f32[32,1], index: 2, kind: input, shape index: {}]
  %s3 = inlined_call_operand.vmem [shape: f32[16,32], index: 3, kind: input, shape index: {}]
  %s4 = inlined_call_operand.vmem [shape: f32[16,1], index: 4, kind: input, shape index: {}]
  %s5 = inlined_call_operand.vmem [shape: f32[16,1], index: 5, kind: input, shape index: {}]
  %s6 = inlined_call_operand.<no memory space> [shape: f32[1,1], index: 6, kind: input, shape index: {}]
  %s7 = inlined_call_operand.hbm [shape: f32[1,128], index: 7, kind: output, shape index: {}]
  %s8 = sld [smem:[#allocation0]]
  $region38: #{tpu_custom_call.1} parent=0
    _
  %s10 = ssub.s32 1, %s8
  %s11 = scalar_select 0, %s10, %s8
  %v12 = vstv %s6
  %13 = vst [vmem:[#allocation2] sm:$0x1] %v12
  $region1: #{tpu_custom_call.1} parent=0
    #allocation3 [shape = 'u8[512]{0}', space=vmem, size = 0x400, scoped, tag = 'output window, operand 0, single buffered']
    #allocation4 [shape = 's32[1]{0}', space=sflag, size = 0x4, scoped, tag = 'scoped memory for tpu_custom_call.1']
    %14 = vsyncpa [#allocation4], 0
    // Predicated region
    $region2: #{tpu_custom_call.1} parent=1 // pred_check
      _
    $region3: #{tpu_custom_call.1} parent=1 // pred_check_branch
      %16 = sbr.rel (0) target = $region5
    $region4: #{tpu_custom_call.1} parent=1 // pred_region
      _
    $region5: #{tpu_custom_call.1} parent=1 // pred_fallthru
      _
    // Predicated region
    $region6: #{tpu_custom_call.1} parent=1 // pred_check
      _
    $region7: #{tpu_custom_call.1} parent=1 // pred_check_branch
      %18 = sbr.rel (0) target = $region9
    $region8: #{tpu_custom_call.1} parent=1 // pred_region
      _
    $region9: #{tpu_custom_call.1} parent=1 // pred_fallthru
      _
    // Predicated region
    $region10: #{tpu_custom_call.1} parent=1 // pred_check
      _
    $region11: #{tpu_custom_call.1} parent=1 // pred_check_branch
      %20 = sbr.rel (0) target = $region13
    $region12: #{tpu_custom_call.1} parent=1 // pred_region
      _
    $region13: #{tpu_custom_call.1} parent=1 // pred_fallthru
      _
    // Predicated region
    $region14: #{tpu_custom_call.1} parent=1 // pred_check
      _
    $region15: #{tpu_custom_call.1} parent=1 // pred_check_branch
      %22 = sbr.rel (0) target = $region17
    $region16: #{tpu_custom_call.1} parent=1 // pred_region
      _
    $region17: #{tpu_custom_call.1} parent=1 // pred_fallthru
      _
    // Predicated region
    $region18: #{tpu_custom_call.1} parent=1 // pred_check
      _
    $region19: #{tpu_custom_call.1} parent=1 // pred_check_branch
      %24 = sbr.rel (0) target = $region21
    $region20: #{tpu_custom_call.1} parent=1 // pred_region
      _
    $region21: #{tpu_custom_call.1} parent=1 // pred_fallthru
      _
    // Predicated region
    $region22: #{tpu_custom_call.1} parent=1 // pred_check
      _
    $region23: #{tpu_custom_call.1} parent=1 // pred_check_branch
      %26 = sbr.rel (0) target = $region25
    $region24: #{tpu_custom_call.1} parent=1 // pred_region
      _
    $region25: #{tpu_custom_call.1} parent=1 // pred_fallthru
      _
    // Predicated region
    $region26: #{tpu_custom_call.1} parent=1 // pred_check
      _
    $region27: #{tpu_custom_call.1} parent=1 // pred_check_branch
      %28 = sbr.rel (0) target = $region29
    $region28: #{tpu_custom_call.1} parent=1 // pred_region
      _
    $region29: #{tpu_custom_call.1} parent=1 // pred_fallthru
      _
    %v29 = vld [vmem:[%s0] sm:$0xff]
    %v30 = vld [vmem:[%s0 + $0x8] sm:$0xff]
    %v31 = vld [vmem:[%s0 + $0x10] sm:$0xff]
    %v32 = vld [vmem:[%s0 + $0x18] sm:$0xff]
    %v33 = vld [vmem:[%s0 + $0x20] sm:$0xff]
    %v34 = vld [vmem:[%s0 + $0x28] sm:$0xff]
    %v35 = vld [vmem:[%s0 + $0x30] sm:$0xff]
    %v36 = vld [vmem:[%s0 + $0x38] sm:$0xff]
    %v37 = vld [vmem:[%s0 + $0x40] sm:$0xff]
    %v38 = vld [vmem:[%s0 + $0x48] sm:$0xff]
    %v39 = vld [vmem:[%s0 + $0x50] sm:$0xff]
    %v40 = vld [vmem:[%s0 + $0x58] sm:$0xff]
    %v41 = vld [vmem:[%s0 + $0x60] sm:$0xff]
    %v42 = vld [vmem:[%s0 + $0x68] sm:$0xff]
    %v43 = vld [vmem:[%s0 + $0x70] sm:$0xff]
    %v44 = vld [vmem:[%s0 + $0x78] sm:$0xff]
    %v45 = vld [vmem:[%s1] sm:$0xff]
    %v46 = vld [vmem:[%s1 + $0x8] sm:$0xff]
    %v47 = vld [vmem:[%s1 + $0x10] sm:$0xff]
    %v48 = vld [vmem:[%s1 + $0x18] sm:$0xff]
    %v49 = vld [vmem:[%s2] sm:$0xff]
    %v50 = vld [vmem:[%s2 + $0x8] sm:$0xff]
    %v51 = vld [vmem:[%s2 + $0x10] sm:$0xff]
    %v52 = vld [vmem:[%s2 + $0x18] sm:$0xff]
    %54 = vset.pattern.permute.xlu0 0
    %55 = vperm.xlu0 %54, %v49
    %v56 = vpop.permute.xlu0 %55
    %59 = vset.pattern.permute.xlu0 0
    %60 = vperm.xlu0 %59, %v50
    %v61 = vpop.permute.xlu0 %60
    %64 = vset.pattern.permute.xlu0 0
    %65 = vperm.xlu0 %64, %v51
    %v66 = vpop.permute.xlu0 %65
    %69 = vset.pattern.permute.xlu0 0
    %70 = vperm.xlu0 %69, %v52
    %v71 = vpop.permute.xlu0 %70
    %vm73 = vcmask 195584
    %v75 = vsel %vm73, %v45, 0
    %v78 = vsel %vm73, %v46, 0
    %v81 = vsel %vm73, %v47, 0
    %v84 = vsel %vm73, %v48, 0
    %v87 = vsel %vm73, %v29, 0
    %v90 = vsel %vm73, %v30, 0
    %v93 = vsel %vm73, %v31, 0
    %v96 = vsel %vm73, %v32, 0
    %v99 = vsel %vm73, %v33, 0
    %v102 = vsel %vm73, %v34, 0
    %v105 = vsel %vm73, %v35, 0
    %v108 = vsel %vm73, %v36, 0
    %v111 = vsel %vm73, %v37, 0
    %v114 = vsel %vm73, %v38, 0
    %v117 = vsel %vm73, %v39, 0
    %v120 = vsel %vm73, %v40, 0
    %v123 = vsel %vm73, %v41, 0
    %v126 = vsel %vm73, %v42, 0
    %v129 = vsel %vm73, %v43, 0
    %v132 = vsel %vm73, %v44, 0
    %134 = vmatprep.subr.mxu0 0.0
    %135 = vmatpush1.xpose.msra.mxu0 %v132
    %136 = vmatprep.subr.mxu0 0.0
    %137 = vmatpush1.xpose.msra.mxu0 %v129
    %138 = vmatprep.subr.mxu0 0.0
    %139 = vmatpush1.xpose.msra.mxu0 %v126
    %140 = vmatprep.subr.mxu0 0.0
    %141 = vmatpush1.xpose.msra.mxu0 %v123
    %142 = vmatprep.subr.mxu0 0.0
    %143 = vmatpush1.xpose.msra.mxu0 %v120
    %144 = vmatprep.subr.mxu0 0.0
    %145 = vmatpush1.xpose.msra.mxu0 %v117
    %146 = vmatprep.subr.mxu0 0.0
    %147 = vmatpush1.xpose.msra.mxu0 %v114
    %148 = vmatprep.subr.mxu0 0.0
    %149 = vmatpush1.xpose.msra.mxu0 %v111
    %150 = vmatprep.subr.mxu0 0.0
    %151 = vmatpush1.xpose.msra.mxu0 %v108
    %152 = vmatprep.subr.mxu0 0.0
    %153 = vmatpush1.xpose.msra.mxu0 %v105
    %154 = vmatprep.subr.mxu0 0.0
    %155 = vmatpush1.xpose.msra.mxu0 %v102
    %156 = vmatprep.subr.mxu0 0.0
    %157 = vmatpush1.xpose.msra.mxu0 %v99
    %158 = vmatprep.subr.mxu0 0.0
    %159 = vmatpush1.xpose.msra.mxu0 %v96
    %160 = vmatprep.subr.mxu0 0.0
    %161 = vmatpush1.xpose.msra.mxu0 %v93
    %162 = vmatprep.subr.mxu0 0.0
    %163 = vmatpush1.xpose.msra.mxu0 %v90
    %164 = vmatprep.subr.mxu0 0.0
    %165 = vmatpush1.xpose.msra.mxu0 %v87
    %166 = vmatprep.subr.mxu0 0.0
    %167 = vmatpush2.xpose.msra.mxu0 0.0
    %168 = vmatprep.subr.mxu0 0.0
    %169 = vmatpush2.xpose.msra.mxu0 0.0
    %170 = vmatprep.subr.mxu0 0.0
    %171 = vmatpush2.xpose.msra.mxu0 0.0
    %172 = vmatprep.subr.mxu0 0.0
    %173 = vmatpush2.xpose.msra.mxu0 0.0
    %174 = vmatprep.subr.mxu0 0.0
    %175 = vmatpush2.xpose.msra.mxu0 0.0
    %176 = vmatprep.subr.mxu0 0.0
    %177 = vmatpush2.xpose.msra.mxu0 0.0
    %178 = vmatprep.subr.mxu0 0.0
    %179 = vmatpush2.xpose.msra.mxu0 0.0
    %180 = vmatprep.subr.mxu0 0.0
    %181 = vmatpush2.xpose.msra.mxu0 0.0
    %182 = vmatprep.subr.mxu0 0.0
    %183 = vmatpush2.xpose.msra.mxu0 0.0
    %184 = vmatprep.subr.mxu0 0.0
    %185 = vmatpush2.xpose.msra.mxu0 0.0
    %186 = vmatprep.subr.mxu0 0.0
    %187 = vmatpush2.xpose.msra.mxu0 0.0
    %188 = vmatprep.subr.mxu0 0.0
    %189 = vmatpush2.xpose.msra.mxu0 0.0
    %190 = vmatprep.subr.mxu0 0.0
    %191 = vmatpush2.xpose.msra.mxu0 0.0
    %192 = vmatprep.subr.mxu0 0.0
    %193 = vmatpush2.xpose.msra.mxu0 0.0
    %194 = vmatprep.subr.mxu0 0.0
    %195 = vmatpush2.xpose.msra.mxu0 0.0
    %196 = vmatprep.subr.mxu0 0.0
    %197 = vmatpush2.xpose.msra.mxu0 0.0
    %198 = vmatprep.mubr.f32.mxu0 0.0
    %199 = vmatmul.mubr.f32.gmra.mxu0 %v75
    %v200 = vpop.f32.mrf.mxu0
    %v201 = vadd.f32 %v56, %v200
    %v202 = vpop.f32.mrf.mxu0
    %203 = vmatprep.mubr.f32.mxu0 0.0
    %204 = vmatmul.mubr.f32.gmra.mxu0 %v78
    %v205 = vpop.f32.mrf.mxu0
    %v206 = vadd.f32 %v61, %v205
    %v207 = vpop.f32.mrf.mxu0
    %208 = vmatprep.mubr.f32.mxu0 0.0
    %209 = vmatmul.mubr.f32.gmra.mxu0 %v81
    %v210 = vpop.f32.mrf.mxu0
    %v211 = vadd.f32 %v66, %v210
    %v212 = vpop.f32.mrf.mxu0
    %213 = vmatprep.mubr.f32.mxu0 0.0
    %214 = vmatmul.mubr.f32.gmra.mxu0 %v84
    %v215 = vpop.f32.mrf.mxu0
    %v216 = vadd.f32 %v71, %v215
    %v217 = vpop.f32.mrf.mxu0
    %218 = vdwg.mxu0
    %v219 = vmax.f32 %v201, 0.0
    %v220 = vmax.f32 %v206, 0.0
    %v221 = vmax.f32 %v211, 0.0
    %v222 = vmax.f32 %v216, 0.0
    %v223 = vld [vmem:[%s3] sm:$0xff]
    %v224 = vld [vmem:[%s3 + $0x8] sm:$0xff]
    %v225 = vld [vmem:[%s4] sm:$0xff]
    %v226 = vld [vmem:[%s4 + $0x8] sm:$0xff]
    %228 = vset.pattern.permute.xlu0 0
    %229 = vperm.xlu0 %228, %v225
    %v230 = vpop.permute.xlu0 %229
    %233 = vset.pattern.permute.xlu0 0
    %234 = vperm.xlu0 %233, %v226
    %v235 = vpop.permute.xlu0 %234
    %vm237 = vcmask 261120
    %v239 = vsel %vm237, %v223, 0
    %v242 = vsel %vm237, %v224, 0
    %244 = vmatprep.subr.mxu0 0.0
    %245 = vmatpush1.msra.mxu0 0.0
    %246 = vmatprep.subr.mxu0 0.0
    %247 = vmatpush1.msra.mxu0 0.0
    %248 = vmatprep.subr.mxu0 0.0
    %249 = vmatpush1.msra.mxu0 0.0
    %250 = vmatprep.subr.mxu0 0.0
    %251 = vmatpush1.msra.mxu0 0.0
    %252 = vmatprep.subr.mxu0 0.0
    %253 = vmatpush1.msra.mxu0 0.0
    %254 = vmatprep.subr.mxu0 0.0
    %255 = vmatpush1.msra.mxu0 0.0
    %256 = vmatprep.subr.mxu0 0.0
    %257 = vmatpush1.msra.mxu0 0.0
    %258 = vmatprep.subr.mxu0 0.0
    %259 = vmatpush1.msra.mxu0 0.0
    %260 = vmatprep.subr.mxu0 0.0
    %261 = vmatpush1.msra.mxu0 0.0
    %262 = vmatprep.subr.mxu0 0.0
    %263 = vmatpush1.msra.mxu0 0.0
    %264 = vmatprep.subr.mxu0 0.0
    %265 = vmatpush1.msra.mxu0 0.0
    %266 = vmatprep.subr.mxu0 0.0
    %267 = vmatpush1.msra.mxu0 0.0
    %268 = vmatprep.subr.mxu0 0.0
    %269 = vmatpush1.msra.mxu0 %v222
    %270 = vmatprep.subr.mxu0 0.0
    %271 = vmatpush1.msra.mxu0 %v221
    %272 = vmatprep.subr.mxu0 0.0
    %273 = vmatpush1.msra.mxu0 %v220
    %274 = vmatprep.subr.mxu0 0.0
    %275 = vmatpush1.msra.mxu0 %v219
    %276 = vmatprep.subr.mxu0 0.0
    %277 = vmatpush2.msra.mxu0 0.0
    %278 = vmatprep.subr.mxu0 0.0
    %279 = vmatpush2.msra.mxu0 0.0
    %280 = vmatprep.subr.mxu0 0.0
    %281 = vmatpush2.msra.mxu0 0.0
    %282 = vmatprep.subr.mxu0 0.0
    %283 = vmatpush2.msra.mxu0 0.0
    %284 = vmatprep.subr.mxu0 0.0
    %285 = vmatpush2.msra.mxu0 0.0
    %286 = vmatprep.subr.mxu0 0.0
    %287 = vmatpush2.msra.mxu0 0.0
    %288 = vmatprep.subr.mxu0 0.0
    %289 = vmatpush2.msra.mxu0 0.0
    %290 = vmatprep.subr.mxu0 0.0
    %291 = vmatpush2.msra.mxu0 0.0
    %292 = vmatprep.subr.mxu0 0.0
    %293 = vmatpush2.msra.mxu0 0.0
    %294 = vmatprep.subr.mxu0 0.0
    %295 = vmatpush2.msra.mxu0 0.0
    %296 = vmatprep.subr.mxu0 0.0
    %297 = vmatpush2.msra.mxu0 0.0
    %298 = vmatprep.subr.mxu0 0.0
    %299 = vmatpush2.msra.mxu0 0.0
    %300 = vmatprep.subr.mxu0 0.0
    %301 = vmatpush2.msra.mxu0 0.0
    %302 = vmatprep.subr.mxu0 0.0
    %303 = vmatpush2.msra.mxu0 0.0
    %304 = vmatprep.subr.mxu0 0.0
    %305 = vmatpush2.msra.mxu0 0.0
    %306 = vmatprep.subr.mxu0 0.0
    %307 = vmatpush2.msra.mxu0 0.0
    %308 = vmatprep.mubr.f32.mxu0 0.0
    %309 = vmatmul.mubr.f32.gmra.mxu0 %v239
    %v310 = vpop.f32.mrf.mxu0
    %v311 = vadd.f32 %v230, %v310
    %v312 = vpop.f32.mrf.mxu0
    %313 = vmatprep.mubr.f32.mxu0 0.0
    %314 = vmatmul.mubr.f32.gmra.mxu0 %v242
    %v315 = vpop.f32.mrf.mxu0
    %v316 = vadd.f32 %v235, %v315
    %v317 = vpop.f32.mrf.mxu0
    %318 = vdwg.mxu0
    %v319 = vmax.f32 %v311, 0.0
    %v320 = vmax.f32 %v316, 0.0
    %v321 = vld [vmem:[%s5] sm:$0xff]
    %v322 = vld [vmem:[%s5 + $0x8] sm:$0xff]
    %324 = vset.pattern.permute.xlu0 0
    %325 = vperm.xlu0 %324, %v321
    %v326 = vpop.permute.xlu0 %325
    %329 = vset.pattern.permute.xlu0 0
    %330 = vperm.xlu0 %329, %v322
    %v331 = vpop.permute.xlu0 %330
    %v333 = vmul.f32 %v319, %v326
    %v334 = vmul.f32 %v320, %v331
    %v335 = vadd.f32 %v333, %v334
    %v336 = vrot.slane %v335, 4
    %v337 = vadd.f32 %v335, %v336
    %v338 = vrot.slane %v337, 2
    %v339 = vadd.f32 %v337, %v338
    %v340 = vrot.slane %v339, 1
    %v341 = vadd.f32 %v339, %v340
    %v342 = vld [vmem:[#allocation2] sm:$0x1]
    %344 = vset.pattern.permute.xlu0 0
    %345 = vperm.xlu0 %344, %v342
    %v346 = vpop.permute.xlu0 %345
    %v348 = vlaneseq
    %v349 = vshrl.u32 %v348, 7
    %v350 = vsub.s32 0, %v349
    %v351 = vrot.slane %v346, %v350
    %v352 = vadd.f32 %v341, %v351
    %353 = vst [vmem:[#allocation3] sm:$0x1] %v352
    // Predicated region
    $region30: #{tpu_custom_call.1} parent=1 // pred_check
      _
    $region31: #{tpu_custom_call.1} parent=1 // pred_check_branch
      %355 = sbr.rel (0) target = $region33
    $region32: #{tpu_custom_call.1} parent=1 // pred_region
      %s357 = ssub.s32 16, 16
      %358 = vsyncadd [#allocation4], %s357
      %s360 = sshll.u32 [#allocation3], 4
      %s361 = int_to_ptr.vmem [resolvable:$true] %s360
      %363 = dma.vmem_to_hbm [thread:$0]  %s361, 16, %s7, [#allocation4]
    $region33: #{tpu_custom_call.1} parent=1 // pred_fallthru
      _
    // Predicated region
    $region34: #{tpu_custom_call.1} parent=1 // pred_check
      _
    $region35: #{tpu_custom_call.1} parent=1 // pred_check_branch
      %365 = sbr.rel (0) target = $region37
    $region36: #{tpu_custom_call.1} parent=1 // pred_region
      %366 = dma.done [#allocation4], 16
    $region37: #{tpu_custom_call.1} parent=1 // pred_fallthru
      _
    %367 = vsyncpa [#allocation4], 1

</llo_original>
